<compile_context>
chip_gen: v6e
topology: v6e:2x2x1
jax: 0.10.0
libtpu: 0.0.40
codegen_flags: <defaults>
</compile_context>

<pallas_src>
import jax
import jax.numpy as jnp
from jax.experimental import pallas as pl
from jax.experimental.pallas import tpu as pltpu


def mlp_kernel(x_ref, w1_ref, b1_ref, w2_ref, b2_ref, o_ref):
    # x_ref:  (TB, D_in)    VMEM, tiled over batch
    # w1_ref: (D_in, D_hid) VMEM, resident across grid steps
    # b1_ref: (1, D_hid)    VMEM, resident
    # w2_ref: (1, D_hid)    VMEM, resident (fc2 weight as a row)
    # b2_ref: (1, 1)        SMEM scalar
    # o_ref:  (1, TB)       VMEM (leading grid dim squeezed), batch along lanes
    x = x_ref[...]
    h = jnp.dot(x, w1_ref[...], preferred_element_type=jnp.float32)    # MXU (TB, D_hid)
    h = jnp.maximum(h + b1_ref[...], 0.0)                              # VPU bias + ReLU
    # fc2 with out_features=1, computed transposed (Q@K^T form):
    #   y[0, b] = sum_j w2[0, j] * h[b, j]  -> (1, TB), lane-dense store.
    y = jax.lax.dot_general(
        w2_ref[...], h,
        dimension_numbers=(((1,), (1,)), ((), ())),
        preferred_element_type=jnp.float32)                            # (1, TB)
    o_ref[...] = (y + b2_ref[0, 0]).astype(o_ref.dtype)


def _tpu_vmem_capacity_bytes(default_bytes=64 << 20):
    try:
        info = pltpu.get_tpu_info()
        cap = getattr(info, "vmem_capacity_bytes", None)
        if cap:
            return int(cap)
    except Exception:
        pass
    return default_bytes


def _choose_batch_tile(batch, vmem_bytes):
    # ~2.5 KiB of VMEM per batch row: x block lane-padded to 128 f32 and
    # double-buffered (~1 KiB/row) + the (TB, 50->128) h temp (~0.5 KiB/row) + headroom.
    per_row_bytes = 2560
    cap = int(vmem_bytes * 0.4) // per_row_bytes
    cap = max(512, min(cap, 16384))
    cap = (cap // 128) * 128
    # Keep >= 2 grid steps when possible so ("parallel",) can use both v7x TCs.
    tb = min(cap, pl.cdiv(batch, 2))
    tb = max(8, ((tb + 7) // 8) * 8)   # f32 sublane multiple
    return tb


def simple_model_forward(x, w1, b1, w2, b2, *, tb=None):
    """x: (B, 10) f32. Returns (B, 1) f32, matching PyTorch fc2(relu(fc1(x))).

    w1: (10, 50) = PyTorch fc1.weight.T,  b1: (50,)
    w2: (50, 1)  = PyTorch fc2.weight.T,  b2: (1,)
    """
    B, D_in = x.shape
    D_hid = w1.shape[1]
    D_out = w2.shape[1]
    assert D_out == 1

    vmem_bytes = _tpu_vmem_capacity_bytes()
    TB = tb if tb is not None else _choose_batch_tile(B, vmem_bytes)
    TB = max(8, ((TB + 7) // 8) * 8)
    G = pl.cdiv(B, TB)

    b1_row = b1.reshape(1, D_hid)
    w2_row = w2.reshape(1, D_hid)   # (50,1) -> (1,50) row
    b2_s = b2.reshape(1, 1)

    # TODO(synk): for very large TB on v7x, an inner fori_loop over 512-row
    # sub-chunks would shrink the (TB, D_hid) h temp; omitted for simplicity.
    out = pl.pallas_call(
        mlp_kernel,
        out_shape=jax.ShapeDtypeStruct((G, 1, TB), jnp.float32),
        grid=(G,),
        in_specs=[
            pl.BlockSpec((TB, D_in), lambda i: (i, 0)),         # x: tiled; ragged last block masked
            pl.BlockSpec((D_in, D_hid), lambda i: (0, 0)),      # w1: resident
            pl.BlockSpec((1, D_hid), lambda i: (0, 0)),         # b1: resident
            pl.BlockSpec((1, D_hid), lambda i: (0, 0)),         # w2 row: resident
            pl.BlockSpec(memory_space=pltpu.MemorySpace.SMEM),  # b2: scalar in SMEM
        ],
        out_specs=pl.BlockSpec((None, 1, TB), lambda i: (i, 0, 0)),  # lane-dense row per step
        compiler_params=pltpu.CompilerParams(
            dimension_semantics=("parallel",),                  # shard batch across TCs (v7x)
            vmem_limit_bytes=int(vmem_bytes * 0.6),
        ),
    )(x, w1, b1_row, w2_row, b2_s)

    # (G, 1, TB) with batch on lanes -> (B, 1); rows past B (ragged tail) are dropped.
    return out.reshape(G * TB, 1)[:B]


if __name__ == "__main__":
    key = jax.random.PRNGKey(0)
    k_x, k_w1, k_b1, k_w2, k_b2 = jax.random.split(key, 5)

    B, D_in, D_hid, D_out = 40, 10, 50, 1

    # Deterministic synthetic params (PyTorch-like uniform init ranges),
    # stored as (in, out) = transpose of PyTorch's (out, in) layout.
    bound1 = 1.0 / (D_in ** 0.5)
    bound2 = 1.0 / (D_hid ** 0.5)
    w1 = jax.random.uniform(k_w1, (D_in, D_hid), jnp.float32, -bound1, bound1)
    b1 = jax.random.uniform(k_b1, (D_hid,), jnp.float32, -bound1, bound1)
    w2 = jax.random.uniform(k_w2, (D_hid, D_out), jnp.float32, -bound2, bound2)
    b2 = jax.random.uniform(k_b2, (D_out,), jnp.float32, -bound2, bound2)

    x = jax.random.normal(k_x, (B, D_in), jnp.float32)

    # Auto tile selection: B=40 -> TB=24, grid=(2,), which exercises the
    # multi-step grid, the ragged (masked) final x block, and the lane-dense
    # output path. Real batches get VMEM-sized tiles automatically.
    out = simple_model_forward(x, w1, b1, w2, b2)
    out = jax.block_until_ready(out)

    # Pure-JAX reference of the same forward pass.
    ref = jnp.maximum(x @ w1 + b1, 0.0) @ w2 + b2
    assert out.shape == (B, D_out)
    assert jnp.allclose(out, ref, atol=1e-4, rtol=1e-5)

    print("KERNEL_OK")
</pallas_src>

<mosaic_0001>
module attributes {stable_mosaic.version = 11 : i64} {
  func.func @mlp_kernel(%arg0: i32, %arg1: memref<24x10xf32, #tpu.memory_space<vmem>>, %arg2: memref<10x50xf32, #tpu.memory_space<vmem>>, %arg3: memref<1x50xf32, #tpu.memory_space<vmem>>, %arg4: memref<1x50xf32, #tpu.memory_space<vmem>>, %arg5: memref<1x1xf32, #tpu.memory_space<smem>>, %arg6: memref<1x1x24xf32, #tpu.memory_space<vmem>>) attributes {dimension_semantics = [#tpu.dimension_semantics<parallel>], iteration_bounds = array<i64: 2>, scalar_prefetch = 0 : i64, scratch_operands = 0 : i64, tpu.core_type = #tpu.core_type<tc>, window_params = [{transform_indices = @transform_0, window_bounds = array<i64: 24, 10>}, {pipeline_mode = #tpu.pipeline_mode<synchronous>, transform_indices = @transform_1, window_bounds = array<i64: 10, 50>}, {pipeline_mode = #tpu.pipeline_mode<synchronous>, transform_indices = @transform_2, window_bounds = array<i64: 1, 50>}, {pipeline_mode = #tpu.pipeline_mode<synchronous>, transform_indices = @transform_3, window_bounds = array<i64: 1, 50>}, {transform_indices = @transform_4, window_bounds = array<i64: 1, 1>}, {transform_indices = @transform_5, window_bounds = array<i64: 1, 1, 24>}]} {
    %c0 = arith.constant 0 : index
    %c0_0 = arith.constant 0 : index
    %0 = vector.load %arg1[%c0, %c0_0] : memref<24x10xf32, #tpu.memory_space<vmem>>, vector<24x10xf32>
    %c0_1 = arith.constant 0 : index
    %c0_2 = arith.constant 0 : index
    %1 = vector.load %arg2[%c0_1, %c0_2] : memref<10x50xf32, #tpu.memory_space<vmem>>, vector<10x50xf32>
    %cst = arith.constant dense<0.000000e+00> : vector<24x50xf32>
    %2 = tpu.matmul %0, %1, %cst {dimension_numbers = #tpu.dot_dimension_numbers<[1], [0], [0], [1], [0, 0, 1, 1], [], []>} : vector<24x10xf32>, vector<10x50xf32>, vector<24x50xf32> -> vector<24x50xf32>
    %c0_3 = arith.constant 0 : index
    %c0_4 = arith.constant 0 : index
    %3 = vector.load %arg3[%c0_3, %c0_4] : memref<1x50xf32, #tpu.memory_space<vmem>>, vector<1x50xf32>
    %4 = vector.broadcast %3 : vector<1x50xf32> to vector<24x50xf32>
    %5 = arith.addf %2, %4 : vector<24x50xf32>
    %cst_5 = arith.constant 0.000000e+00 : f32
    %6 = vector.broadcast %cst_5 : f32 to vector<24x50xf32>
    %7 = arith.maximumf %5, %6 : vector<24x50xf32>
    %c0_6 = arith.constant 0 : index
    %c0_7 = arith.constant 0 : index
    %8 = vector.load %arg4[%c0_6, %c0_7] : memref<1x50xf32, #tpu.memory_space<vmem>>, vector<1x50xf32>
    %cst_8 = arith.constant dense<0.000000e+00> : vector<1x24xf32>
    %9 = tpu.matmul %8, %7, %cst_8 {dimension_numbers = #tpu.dot_dimension_numbers<[1], [1], [0], [0], [0, 0, 1, 0], [], []>} : vector<1x50xf32>, vector<24x50xf32>, vector<1x24xf32> -> vector<1x24xf32>
    %c0_9 = arith.constant 0 : index
    %c0_10 = arith.constant 0 : index
    %10 = memref.load %arg5[%c0_9, %c0_10] : memref<1x1xf32, #tpu.memory_space<smem>>
    %11 = vector.broadcast %10 : f32 to vector<1x24xf32>
    %12 = arith.addf %9, %11 : vector<1x24xf32>
    %c0_11 = arith.constant 0 : index
    %c0_12 = arith.constant 0 : index
    %c0_13 = arith.constant 0 : index
    %13 = vector.load %arg6[%c0_11, %c0_12, %c0_13] : memref<1x1x24xf32, #tpu.memory_space<vmem>>, vector<1x1x24xf32>
    %14 = vector.shape_cast %13 : vector<1x1x24xf32> to vector<1x24xf32>
    %15 = vector.shape_cast %12 : vector<1x24xf32> to vector<1x1x24xf32>
    tpu.vector_store %arg6[%c0_11, %c0_12, %c0_13], %15 {strides = array<i32>} : memref<1x1x24xf32, #tpu.memory_space<vmem>>, vector<1x1x24xf32>,
    return
  }
  func.func @transform_0(%arg0: i32) -> (i32, i32) {
    %c0_i32 = arith.constant 0 : i32
    %c0_i32_0 = arith.constant 0 : i32
    return %arg0, %c0_i32 : i32, i32
  }
  func.func @transform_1(%arg0: i32) -> (i32, i32) {
    %c0_i32 = arith.constant 0 : i32
    %c0_i32_0 = arith.constant 0 : i32
    %c0_i32_1 = arith.constant 0 : i32
    return %c0_i32, %c0_i32_0 : i32, i32
  }
  func.func @transform_2(%arg0: i32) -> (i32, i32) {
    %c0_i32 = arith.constant 0 : i32
    %c0_i32_0 = arith.constant 0 : i32
    %c0_i32_1 = arith.constant 0 : i32
    return %c0_i32, %c0_i32_0 : i32, i32
  }
  func.func @transform_3(%arg0: i32) -> (i32, i32) {
    %c0_i32 = arith.constant 0 : i32
    %c0_i32_0 = arith.constant 0 : i32
    %c0_i32_1 = arith.constant 0 : i32
    return %c0_i32, %c0_i32_0 : i32, i32
  }
  func.func @transform_4(%arg0: i32) -> (i32, i32) {
    %c0_i32 = arith.constant 0 : i32
    %c0_i32_0 = arith.constant 0 : i32
    %c0_i32_1 = arith.constant 0 : i32
    return %c0_i32, %c0_i32_0 : i32, i32
  }
  func.func @transform_5(%arg0: i32) -> (i32, i32, i32) {
    %c0_i32 = arith.constant 0 : i32
    %c0_i32_0 = arith.constant 0 : i32
    %c0_i32_1 = arith.constant 0 : i32
    return %arg0, %c0_i32, %c0_i32_0 : i32, i32, i32
  }
}

</mosaic_0001>

<llo_original>
// kernel: tpu_custom_call.1
$region0: #{tpu_custom_call.1}
  #allocation0 [shape = 'u32[]', space=smem, size = 0x4, offset = 0x4, fixed_abs, tag = 'smem constant byte address 0x4 - core index']
  #allocation1 [shape = 'u32[144,128]{1,0:T(1,128)}', space=vmem, size = 0x12000, scoped, tag = 'internal scratch']
  #allocation2 [shape = 'f32[1,1]{1,0:T(1,128)S(6)}', space=smem, size = 0x200, scoped, tag = 'scoped memory for tpu_custom_call.1']
  %s0 = inlined_call_operand.vmem [shape: f32[40,10], index: 0, kind: input, shape index: {}]
  %s1 = inlined_call_operand.vmem [shape: f32[10,50], index: 1, kind: input, shape index: {}]
  %s2 = inlined_call_operand.vmem [shape: f32[1,50], index: 2, kind: input, shape index: {}]
  %s3 = inlined_call_operand.vmem [shape: f32[1,50], index: 3, kind: input, shape index: {}]
  %s4 = inlined_call_operand.<no memory space> [shape: f32[1,1], index: 4, kind: input, shape index: {}]
  %s5 = inlined_call_operand.hbm [shape: f32[2,1,24], index: 5, kind: output, shape index: {}]
  %s6 = sld [smem:[#allocation0]]
  $region53: #{tpu_custom_call.1} parent=0
    _
  %s8 = ssub.s32 1, %s6
  %s9 = scalar_select 0, %s8, %s6
  %10 = sst [smem:[#allocation2]] %s4
  $region1: #{tpu_custom_call.1} parent=0
    #allocation3 [shape = 'u8[1024]{0}', space=vmem, size = 0x400, scoped, tag = 'output window, operand 0']
    #allocation4 [shape = 's32[2]{0}', space=sflag, size = 0x8, scoped, tag = 'scoped memory for tpu_custom_call.1']
    %11 = vsyncpa [#allocation4], 0
    %s12 = scalar_lea.sflag [#allocation4], 1
    %13 = vsyncpa %s12, 0
    loop: start=0, step=1, limit=4
    $region2: #{tpu_custom_call.1} parent=1 // loop_pre_header
      _
    $region3: #{tpu_custom_call.1} parent=1 // loop_header
      %s15 = sphi 0, %s19
      %p16 = scmp.ge.s32.totalorder %s15, 4
      %s25 = sphi 0, %s27
      %s28 = sphi 0, %s25
      %s29 = sphi 0, %s28
      %s45 = sphi 0, %s29
      %s49 = sphi 0, %s49
      %s51 = sphi 0, %s49
      %s52 = sphi 0, %s51
      %s66 = sphi 0, %s52
      %s70 = sphi 0, %s70
      %s72 = sphi 0, %s70
      %s73 = sphi 0, %s72
      %s87 = sphi 0, %s73
      %s91 = sphi 0, %s91
      %s93 = sphi 0, %s91
      %s94 = sphi 0, %s93
      %s108 = sphi 0, %s94
      %s112 = sphi 0, %s112
      %s114 = sphi 0, %s112
      %s115 = sphi 0, %s114
      %s129 = sphi 0, %s115
      %s135 = sphi 0, %s137
      %s138 = sphi 0, %s135
      %s139 = sphi 0, %s138
      %s155 = sphi 0, %s139
    $region4: #{tpu_custom_call.1} parent=1 // loop_header_branch
      %18 = sbr.rel (%p16) target = $region8
    $region5: #{tpu_custom_call.1} parent=1 // loop_body
      %s20 = ssub.s32 %s15, 1
      %s21 = ssub.s32 %s15, 2
      %s22 = sadd.s32 %s15, 1
      %s23 = ssub.s32 %s15, %s22
      %p24 = scmp.eq.s32.totalorder %s23, 0
      %s26 = sadd.s32 %s25, 1
      %s27 = scalar_select %p24, %s25, %s26
      %p30 = pneg %p24
      %p31 = scmp.eq.s32.totalorder %s15, 1
      %p32 = por %p30, %p31
      %p33 = scmp.ne.s32.totalorder %s25, %s28
      %p34 = scmp.eq.s32.totalorder %s15, 0
      %p35 = por %p33, %p34
      %p36 = scmp.ne.s32.totalorder %s25, %s28
      %p37 = scmp.eq.s32.totalorder %s20, 1
      %p38 = por %p36, %p37
      %p39 = scmp.ne.s32.totalorder %s28, %s29
      %p40 = scmp.eq.s32.totalorder %s20, 0
      %p41 = por %p39, %p40
      %p42 = scmp.ne.s32.totalorder %s28, %s29
      %p43 = scmp.eq.s32.totalorder %s21, 1
      %p44 = por %p42, %p43
      %p46 = scmp.ne.s32.totalorder %s29, %s45
      %p47 = scmp.eq.s32.totalorder %s21, 0
      %p48 = por %p46, %p47
      %s50 = sadd.s32 %s49, 1
      %p53 = scmp.eq.s32.totalorder %s15, 1
      %p54 = scmp.ne.s32.totalorder %s49, %s51
      %p55 = scmp.eq.s32.totalorder %s15, 0
      %p56 = por %p54, %p55
      %p57 = scmp.ne.s32.totalorder %s49, %s51
      %p58 = scmp.eq.s32.totalorder %s20, 1
      %p59 = por %p57, %p58
      %p60 = scmp.ne.s32.totalorder %s51, %s52
      %p61 = scmp.eq.s32.totalorder %s20, 0
      %p62 = por %p60, %p61
      %p63 = scmp.ne.s32.totalorder %s51, %s52
      %p64 = scmp.eq.s32.totalorder %s21, 1
      %p65 = por %p63, %p64
      %p67 = scmp.ne.s32.totalorder %s52, %s66
      %p68 = scmp.eq.s32.totalorder %s21, 0
      %p69 = por %p67, %p68
      %s71 = sadd.s32 %s70, 1
      %p74 = scmp.eq.s32.totalorder %s15, 1
      %p75 = scmp.ne.s32.totalorder %s70, %s72
      %p76 = scmp.eq.s32.totalorder %s15, 0
      %p77 = por %p75, %p76
      %p78 = scmp.ne.s32.totalorder %s70, %s72
      %p79 = scmp.eq.s32.totalorder %s20, 1
      %p80 = por %p78, %p79
      %p81 = scmp.ne.s32.totalorder %s72, %s73
      %p82 = scmp.eq.s32.totalorder %s20, 0
      %p83 = por %p81, %p82
      %p84 = scmp.ne.s32.totalorder %s72, %s73
      %p85 = scmp.eq.s32.totalorder %s21, 1
      %p86 = por %p84, %p85
      %p88 = scmp.ne.s32.totalorder %s73, %s87
      %p89 = scmp.eq.s32.totalorder %s21, 0
      %p90 = por %p88, %p89
      %s92 = sadd.s32 %s91, 1
      %p95 = scmp.eq.s32.totalorder %s15, 1
      %p96 = scmp.ne.s32.totalorder %s91, %s93
      %p97 = scmp.eq.s32.totalorder %s15, 0
      %p98 = por %p96, %p97
      %p99 = scmp.ne.s32.totalorder %s91, %s93
      %p100 = scmp.eq.s32.totalorder %s20, 1
      %p101 = por %p99, %p100
      %p102 = scmp.ne.s32.totalorder %s93, %s94
      %p103 = scmp.eq.s32.totalorder %s20, 0
      %p104 = por %p102, %p103
      %p105 = scmp.ne.s32.totalorder %s93, %s94
      %p106 = scmp.eq.s32.totalorder %s21, 1
      %p107 = por %p105, %p106
      %p109 = scmp.ne.s32.totalorder %s94, %s108
      %p110 = scmp.eq.s32.totalorder %s21, 0
      %p111 = por %p109, %p110
      %s113 = sadd.s32 %s112, 1
      %p116 = scmp.eq.s32.totalorder %s15, 1
      %p117 = scmp.ne.s32.totalorder %s112, %s114
      %p118 = scmp.eq.s32.totalorder %s15, 0
      %p119 = por %p117, %p118
      %p120 = scmp.ne.s32.totalorder %s112, %s114
      %p121 = scmp.eq.s32.totalorder %s20, 1
      %p122 = por %p120, %p121
      %p123 = scmp.ne.s32.totalorder %s114, %s115
      %p124 = scmp.eq.s32.totalorder %s20, 0
      %p125 = por %p123, %p124
      %p126 = scmp.ne.s32.totalorder %s114, %s115
      %p127 = scmp.eq.s32.totalorder %s21, 1
      %p128 = por %p126, %p127
      %p130 = scmp.ne.s32.totalorder %s115, %s129
      %p131 = scmp.eq.s32.totalorder %s21, 0
      %p132 = por %p130, %p131
      %s133 = ssub.s32 %s15, %s22
      %p134 = scmp.eq.s32.totalorder %s133, 0
      %s136 = sadd.s32 %s135, 1
      %s137 = scalar_select %p134, %s135, %s136
      %p140 = pneg %p134
      %p141 = scmp.eq.s32.totalorder %s15, 1
      %p142 = por %p140, %p141
      %p143 = scmp.ne.s32.totalorder %s135, %s138
      %p144 = scmp.eq.s32.totalorder %s15, 0
      %p145 = por %p143, %p144
      %p146 = scmp.ne.s32.totalorder %s135, %s138
      %p147 = scmp.eq.s32.totalorder %s20, 1
      %p148 = por %p146, %p147
      %p149 = scmp.ne.s32.totalorder %s138, %s139
      %p150 = scmp.eq.s32.totalorder %s20, 0
      %p151 = por %p149, %p150
      %p152 = scmp.ne.s32.totalorder %s138, %s139
      %p153 = scmp.eq.s32.totalorder %s21, 1
      %p154 = por %p152, %p153
      %p156 = scmp.ne.s32.totalorder %s139, %s155
      %p157 = scmp.eq.s32.totalorder %s21, 0
      %p158 = por %p156, %p157
      %p159 = scmp.le.s32.totalorder 1, %s15
      %p160 = scmp.lt.s32.totalorder %s15, 3
      %p161 = pnand %p159, %p160
      %p162 = pneg %p161
      // Predicated region
      $region9: #{tpu_custom_call.1} parent=5 // pred_check
        _
      $region10: #{tpu_custom_call.1} parent=5 // pred_check_branch
        %164 = sbr.rel (%p161) target = $region12
      $region11: #{tpu_custom_call.1} parent=5 // pred_region
        %s165 = ssub.s32 %s15, 1
        // Predicated region
        $region13: #{tpu_custom_call.1} parent=11 // pred_check
          %p166 = pneg %p62
        $region14: #{tpu_custom_call.1} parent=11 // pred_check_branch
          %168 = sbr.rel (%p166) target = $region16
        $region15: #{tpu_custom_call.1} parent=11 // pred_region
          _
        $region16: #{tpu_custom_call.1} parent=11 // pred_fallthru
          _
        // Predicated region
        $region17: #{tpu_custom_call.1} parent=11 // pred_check
          %p169 = pneg %p83
        $region18: #{tpu_custom_call.1} parent=11 // pred_check_branch
          %171 = sbr.rel (%p169) target = $region20
        $region19: #{tpu_custom_call.1} parent=11 // pred_region
          _
        $region20: #{tpu_custom_call.1} parent=11 // pred_fallthru
          _
        // Predicated region
        $region21: #{tpu_custom_call.1} parent=11 // pred_check
          %p172 = pneg %p104
        $region22: #{tpu_custom_call.1} parent=11 // pred_check_branch
          %174 = sbr.rel (%p172) target = $region24
        $region23: #{tpu_custom_call.1} parent=11 // pred_region
          _
        $region24: #{tpu_custom_call.1} parent=11 // pred_fallthru
          _
        // Predicated region
        $region25: #{tpu_custom_call.1} parent=11 // pred_check
          %p175 = pneg %p125
        $region26: #{tpu_custom_call.1} parent=11 // pred_check_branch
          %177 = sbr.rel (%p175) target = $region28
        $region27: #{tpu_custom_call.1} parent=11 // pred_region
          _
        $region28: #{tpu_custom_call.1} parent=11 // pred_fallthru
          _
      $region12: #{tpu_custom_call.1} parent=5 // pred_fallthru
        _
      %p178 = scmp.lt.s32.totalorder %s15, 2
      // Predicated region
      $region29: #{tpu_custom_call.1} parent=5 // pred_check
        %p179 = pneg %p178
      $region30: #{tpu_custom_call.1} parent=5 // pred_check_branch
        %181 = sbr.rel (%p179) target = $region32
      $region31: #{tpu_custom_call.1} parent=5 // pred_region
        // Predicated region
        $region33: #{tpu_custom_call.1} parent=31 // pred_check
          %p182 = pneg %p35
        $region34: #{tpu_custom_call.1} parent=31 // pred_check_branch
          %184 = sbr.rel (%p182) target = $region36
        $region35: #{tpu_custom_call.1} parent=31 // pred_region
          %s185 = smul.u32 3, %s15
          %s186 = ssub.s32 5, %s185
          %p187 = scmp.lt.s32.totalorder %s186, 3
          %s188 = scalar_select %p187, %s186, 3
          %s189 = smul.u32 128, %s188
          %p190 = scmp.lt.s32.totalorder %s185, 4
          %s191 = scalar_select %p190, %s185, 4
          %s192 = smul.addr %s191, 8
          %s193 = scalar_lea.vmem %s0, %s192
          %s194 = smul.u32 3, %s15
          %s195 = ssub.s32 5, %s194
          %p196 = scmp.lt.s32.totalorder %s195, 3
          %s197 = scalar_select %p196, %s195, 3
          %s198 = smul.u32 128, %s197
        $region36: #{tpu_custom_call.1} parent=31 // pred_fallthru
          _
      $region32: #{tpu_custom_call.1} parent=5 // pred_fallthru
        _
      %p199 = scmp.le.s32.totalorder 1, %s15
      %p200 = scmp.lt.s32.totalorder %s15, 3
      %p201 = pnand %p199, %p200
      %p202 = pneg %p201
      // Predicated region
      $region37: #{tpu_custom_call.1} parent=5 // pred_check
        _
      $region38: #{tpu_custom_call.1} parent=5 // pred_check_branch
        %204 = sbr.rel (%p201) target = $region40
      $region39: #{tpu_custom_call.1} parent=5 // pred_region
        %s205 = ssub.s32 %s15, 1
        %s206 = smul.u32 3, %s20
        %s207 = ssub.s32 5, %s206
        %p208 = scmp.lt.s32.totalorder %s207, 3
        %s209 = scalar_select %p208, %s207, 3
        %s210 = smul.u32 128, %s209
        %p211 = scmp.lt.s32.totalorder %s206, 4
        %s212 = scalar_select %p211, %s206, 4
        %s213 = smul.addr %s212, 8
        %s214 = scalar_lea.vmem %s0, %s213
        %p215 = pneg %p41
        %p216 = pneg %p38
        %p217 = pneg %p62
        %p218 = pneg %p59
        %p219 = pneg %p83
        %p220 = pneg %p80
        %p221 = pneg %p104
        %p222 = pneg %p101
        %p223 = pneg %p125
        %p224 = pneg %p122
        %p225 = pneg %p151
        %p226 = pneg %p148
        %s227 = sand.u32 %s138, 1
        %s228 = scalar_lea.sflag [#allocation4], %s227
        %s229 = sand.u32 %s138, 1
        %s230 = scalar_lea.vmem [#allocation3], %s229
        %s231 = smul.u32 3, %s20
        %s232 = ssub.s32 5, %s231
        %p233 = scmp.lt.s32.totalorder %s232, 3
        %s234 = scalar_select %p233, %s232, 3
        %s235 = smul.u32 128, %s234
        %p236 = scmp.lt.s32.totalorder %s231, 4
        %s237 = scalar_select %p236, %s231, 4
        %s238 = smul.addr %s237, 8
        %s239 = scalar_lea.vmem %s0, %s238
        %s240 = smul.u32 3, %s20
        %s241 = ssub.s32 5, %s240
        %p242 = scmp.lt.s32.totalorder %s241, 3
        %s243 = scalar_select %p242, %s241, 3
        %s244 = smul.u32 128, %s243
        %v245 = vld [vmem:[%s239] sm:$0xff]
        %v246 = vld [vmem:[%s239 + $0x8] sm:$0xff]
        %v247 = vld [vmem:[%s239 + $0x10] sm:$0xff]
        %v248 = vld [vmem:[%s1] sm:$0xff]
        %v249 = vld [vmem:[%s1 + $0x8] sm:$0x3]
        %v250 = vld [vmem:[%s2] sm:$0x1]
        %v252 = vlaneseq
        %v253 = vshrl.u32 %v252, 7
        %v254 = vsub.s32 0, %v253
        %v255 = vrot.slane %v250, %v254
        %vm257 = vcmask 80896
        %v259 = vsel %vm257, %v245, 0
        %v262 = vsel %vm257, %v246, 0
        %v265 = vsel %vm257, %v247, 0
        %vm267 = vcmask 1041408
        %v269 = vsel %vm267, %v249, 0
        %271 = vmatprep.subr.mxu0 0.0
        %272 = vmatpush1.msra.mxu0 0.0
        %273 = vmatprep.subr.mxu0 0.0
        %274 = vmatpush1.msra.mxu0 0.0
        %275 = vmatprep.subr.mxu0 0.0
        %276 = vmatpush1.msra.mxu0 0.0
        %277 = vmatprep.subr.mxu0 0.0
        %278 = vmatpush1.msra.mxu0 0.0
        %279 = vmatprep.subr.mxu0 0.0
        %280 = vmatpush1.msra.mxu0 0.0
        %281 = vmatprep.subr.mxu0 0.0
        %282 = vmatpush1.msra.mxu0 0.0
        %283 = vmatprep.subr.mxu0 0.0
        %284 = vmatpush1.msra.mxu0 0.0
        %285 = vmatprep.subr.mxu0 0.0
        %286 = vmatpush1.msra.mxu0 0.0
        %287 = vmatprep.subr.mxu0 0.0
        %288 = vmatpush1.msra.mxu0 0.0
        %289 = vmatprep.subr.mxu0 0.0
        %290 = vmatpush1.msra.mxu0 0.0
        %291 = vmatprep.subr.mxu0 0.0
        %292 = vmatpush1.msra.mxu0 0.0
        %293 = vmatprep.subr.mxu0 0.0
        %294 = vmatpush1.msra.mxu0 0.0
        %295 = vmatprep.subr.mxu0 0.0
        %296 = vmatpush1.msra.mxu0 0.0
        %297 = vmatprep.subr.mxu0 0.0
        %298 = vmatpush1.msra.mxu0 0.0
        %299 = vmatprep.subr.mxu0 0.0
        %300 = vmatpush1.msra.mxu0 %v269
        %301 = vmatprep.subr.mxu0 0.0
        %302 = vmatpush1.msra.mxu0 %v248
        %303 = vmatprep.subr.mxu0 0.0
        %304 = vmatpush2.msra.mxu0 0.0
        %305 = vmatprep.subr.mxu0 0.0
        %306 = vmatpush2.msra.mxu0 0.0
        %307 = vmatprep.subr.mxu0 0.0
        %308 = vmatpush2.msra.mxu0 0.0
        %309 = vmatprep.subr.mxu0 0.0
        %310 = vmatpush2.msra.mxu0 0.0
        %311 = vmatprep.subr.mxu0 0.0
        %312 = vmatpush2.msra.mxu0 0.0
        %313 = vmatprep.subr.mxu0 0.0
        %314 = vmatpush2.msra.mxu0 0.0
        %315 = vmatprep.subr.mxu0 0.0
        %316 = vmatpush2.msra.mxu0 0.0
        %317 = vmatprep.subr.mxu0 0.0
        %318 = vmatpush2.msra.mxu0 0.0
        %319 = vmatprep.subr.mxu0 0.0
        %320 = vmatpush2.msra.mxu0 0.0
        %321 = vmatprep.subr.mxu0 0.0
        %322 = vmatpush2.msra.mxu0 0.0
        %323 = vmatprep.subr.mxu0 0.0
        %324 = vmatpush2.msra.mxu0 0.0
        %325 = vmatprep.subr.mxu0 0.0
        %326 = vmatpush2.msra.mxu0 0.0
        %327 = vmatprep.subr.mxu0 0.0
        %328 = vmatpush2.msra.mxu0 0.0
        %329 = vmatprep.subr.mxu0 0.0
        %330 = vmatpush2.msra.mxu0 0.0
        %331 = vmatprep.subr.mxu0 0.0
        %332 = vmatpush2.msra.mxu0 0.0
        %333 = vmatprep.subr.mxu0 0.0
        %334 = vmatpush2.msra.mxu0 0.0
        %335 = vmatprep.mubr.f32.mxu0 0.0
        %336 = vmatmul.mubr.f32.gmra.mxu0 %v259
        %v337 = vpop.f32.mrf.mxu0
        %v338 = vadd.f32 %v255, %v337
        %v339 = vpop.f32.mrf.mxu0
        %340 = vmatprep.mubr.f32.mxu0 0.0
        %341 = vmatmul.mubr.f32.gmra.mxu0 %v262
        %v342 = vpop.f32.mrf.mxu0
        %v343 = vadd.f32 %v255, %v342
        %v344 = vpop.f32.mrf.mxu0
        %345 = vmatprep.mubr.f32.mxu0 0.0
        %346 = vmatmul.mubr.f32.gmra.mxu0 %v265
        %v347 = vpop.f32.mrf.mxu0
        %v348 = vadd.f32 %v255, %v347
        %v349 = vpop.f32.mrf.mxu0
        %350 = vdwg.mxu0
        %v351 = vmax.f32 %v338, 0.0
        %v352 = vmax.f32 %v343, 0.0
        %v353 = vmax.f32 %v348, 0.0
        %v354 = vld [vmem:[%s3] sm:$0x1]
        %s355 = sld [smem:[#allocation2]]
        %v356 = vstv %s355
        %vm357 = vcmask 408576
        %v359 = vsel %vm357, %v354, 0
        %v362 = vsel %vm357, %v351, 0
        %v365 = vsel %vm357, %v352, 0
        %v368 = vsel %vm357, %v353, 0
        %370 = vmatprep.subr.mxu0 0.0
        %371 = vmatpush1.xpose.msra.mxu0 0.0
        %372 = vmatprep.subr.mxu0 0.0
        %373 = vmatpush1.xpose.msra.mxu0 0.0
        %374 = vmatprep.subr.mxu0 0.0
        %375 = vmatpush1.xpose.msra.mxu0 0.0
        %376 = vmatprep.subr.mxu0 0.0
        %377 = vmatpush1.xpose.msra.mxu0 0.0
        %378 = vmatprep.subr.mxu0 0.0
        %379 = vmatpush1.xpose.msra.mxu0 0.0
        %380 = vmatprep.subr.mxu0 0.0
        %381 = vmatpush1.xpose.msra.mxu0 0.0
        %382 = vmatprep.subr.mxu0 0.0
        %383 = vmatpush1.xpose.msra.mxu0 0.0
        %384 = vmatprep.subr.mxu0 0.0
        %385 = vmatpush1.xpose.msra.mxu0 0.0
        %386 = vmatprep.subr.mxu0 0.0
        %387 = vmatpush1.xpose.msra.mxu0 0.0
        %388 = vmatprep.subr.mxu0 0.0
        %389 = vmatpush1.xpose.msra.mxu0 0.0
        %390 = vmatprep.subr.mxu0 0.0
        %391 = vmatpush1.xpose.msra.mxu0 0.0
        %392 = vmatprep.subr.mxu0 0.0
        %393 = vmatpush1.xpose.msra.mxu0 0.0
        %394 = vmatprep.subr.mxu0 0.0
        %395 = vmatpush1.xpose.msra.mxu0 0.0
        %396 = vmatprep.subr.mxu0 0.0
        %397 = vmatpush1.xpose.msra.mxu0 %v368
        %398 = vmatprep.subr.mxu0 0.0
        %399 = vmatpush1.xpose.msra.mxu0 %v365
        %400 = vmatprep.subr.mxu0 0.0
        %401 = vmatpush1.xpose.msra.mxu0 %v362
        %402 = vmatprep.subr.mxu0 0.0
        %403 = vmatpush2.xpose.msra.mxu0 0.0
        %404 = vmatprep.subr.mxu0 0.0
        %405 = vmatpush2.xpose.msra.mxu0 0.0
        %406 = vmatprep.subr.mxu0 0.0
        %407 = vmatpush2.xpose.msra.mxu0 0.0
        %408 = vmatprep.subr.mxu0 0.0
        %409 = vmatpush2.xpose.msra.mxu0 0.0
        %410 = vmatprep.subr.mxu0 0.0
        %411 = vmatpush2.xpose.msra.mxu0 0.0
        %412 = vmatprep.subr.mxu0 0.0
        %413 = vmatpush2.xpose.msra.mxu0 0.0
        %414 = vmatprep.subr.mxu0 0.0
        %415 = vmatpush2.xpose.msra.mxu0 0.0
        %416 = vmatprep.subr.mxu0 0.0
        %417 = vmatpush2.xpose.msra.mxu0 0.0
        %418 = vmatprep.subr.mxu0 0.0
        %419 = vmatpush2.xpose.msra.mxu0 0.0
        %420 = vmatprep.subr.mxu0 0.0
        %421 = vmatpush2.xpose.msra.mxu0 0.0
        %422 = vmatprep.subr.mxu0 0.0
        %423 = vmatpush2.xpose.msra.mxu0 0.0
        %424 = vmatprep.subr.mxu0 0.0
        %425 = vmatpush2.xpose.msra.mxu0 0.0
        %426 = vmatprep.subr.mxu0 0.0
        %427 = vmatpush2.xpose.msra.mxu0 0.0
        %428 = vmatprep.subr.mxu0 0.0
        %429 = vmatpush2.xpose.msra.mxu0 0.0
        %430 = vmatprep.subr.mxu0 0.0
        %431 = vmatpush2.xpose.msra.mxu0 0.0
        %432 = vmatprep.subr.mxu0 0.0
        %433 = vmatpush2.xpose.msra.mxu0 0.0
        %434 = vmatprep.mubr.f32.mxu0 0.0
        %435 = vmatmul.mubr.f32.gmra.mxu0 %v359
        %v436 = vpop.f32.mrf.mxu0
        %v437 = vadd.f32 %v356, %v436
        %v438 = vpop.f32.mrf.mxu0
        %439 = vdwg.mxu0
        %vm440 = vcmask 188416
        %441 = vst.msk [vmem:[%s230] sm:$0x1] %vm440, %v437
        %s442 = sand.u32 %s138, 1
        %s443 = scalar_lea.sflag [#allocation4], %s442
        %s444 = sand.u32 %s138, 1
        %s445 = scalar_lea.vmem [#allocation3], %s444
        // Predicated region
        $region41: #{tpu_custom_call.1} parent=39 // pred_check
          %p446 = pneg %p148
        $region42: #{tpu_custom_call.1} parent=39 // pred_check_branch
          %448 = sbr.rel (%p446) target = $region44
        $region43: #{tpu_custom_call.1} parent=39 // pred_region
          %s450 = ssub.s32 16, 16
          %451 = vsyncadd %s443, %s450
          %s452 = smul.addr %s20, 16
          %s453 = scalar_lea.hbm %s5, %s452
          %s455 = sshll.u32 %s445, 4
          %s456 = int_to_ptr.vmem [resolvable:$true] %s455
          %458 = dma.vmem_to_hbm [thread:$0]  %s456, 16, %s453, %s443
        $region44: #{tpu_custom_call.1} parent=39 // pred_fallthru
          _
      $region40: #{tpu_custom_call.1} parent=5 // pred_fallthru
        _
      %p459 = scmp.le.s32.totalorder 2, %s15
      // Predicated region
      $region45: #{tpu_custom_call.1} parent=5 // pred_check
        %p460 = pneg %p459
      $region46: #{tpu_custom_call.1} parent=5 // pred_check_branch
        %462 = sbr.rel (%p460) target = $region48
      $region47: #{tpu_custom_call.1} parent=5 // pred_region
        %s463 = ssub.s32 %s15, 2
        // Predicated region
        $region49: #{tpu_custom_call.1} parent=47 // pred_check
          %p464 = pneg %p154
        $region50: #{tpu_custom_call.1} parent=47 // pred_check_branch
          %466 = sbr.rel (%p464) target = $region52
        $region51: #{tpu_custom_call.1} parent=47 // pred_region
          %s467 = sand.u32 %s139, 1
          %s468 = scalar_lea.sflag [#allocation4], %s467
          %s469 = sand.u32 %s139, 1
          %s470 = scalar_lea.vmem [#allocation3], %s469
          %471 = dma.done %s468, 16
        $region52: #{tpu_custom_call.1} parent=47 // pred_fallthru
          _
      $region48: #{tpu_custom_call.1} parent=5 // pred_fallthru
        _
    $region6: #{tpu_custom_call.1} parent=1 // loop_footer
      %s19 = sadd.s32 1, %s15
    $region7: #{tpu_custom_call.1} parent=1 // loop_footer_branch
      %14 = sbr.rel target = $region3
    $region8: #{tpu_custom_call.1} parent=1 // loop_exit
      _
    %472 = vsyncpa [#allocation4], 1
    %s473 = scalar_lea.sflag [#allocation4], 1
    %474 = vsyncpa %s473, 1

</llo_original>
